<compile_context>
chip_gen: v6e
topology: v6e:2x2x1
jax: 0.10.0
libtpu: 0.0.40
codegen_flags: <defaults>
</compile_context>

<pallas_src>
import jax
import jax.numpy as jnp
from jax.experimental import pallas as pl
from jax.experimental.pallas import tpu as pltpu

# Model hyperparameters (small, consistent with the module: unidirectional, 2 layers)
INPUT_SIZE = 28
HIDDEN_DIM = 32
LAYER_DIM = 2      # the kernel below hard-codes exactly 2 stacked LSTM layers
OUTPUT_SIZE = 10
BATCH = 2
SEQ = 8
BP = 8             # batch padded to the 8-sublane minimum


def lstm2_fc_kernel(x_ref, wxin_ref, bwide_ref, wblk_ref, wfc_ref, bfc_ref,
                    out_ref):
    """Wavefront-fused 2-layer LSTM over time, then Linear on last hidden.

    x_ref:    (S*BP, I+1)  time-major, batch-padded; S = T+1 wavefront steps;
                           last column is a "ones" feature (0 at step 0) that
                           injects the layer-1 bias for steps >= 1.
    wxin:     (I+1, 8H)    layer-0 input weights in the (i0,i1,f0,f1,o0,o1,g0,g1)
                           interleaved column layout; row I carries b1.
    bwide:    (1, 8H)      layer-0 bias (b_ih0+b_hh0) in layer-0 columns.
    wblk:     (2H, 8H)     fused recurrent block weight [[Whh0, Wih1],[0, Whh1]].
    wfc:      (2H, O)      fc weight, h1 rows zeroed.   bfc: (1, O)
    out:      (BP, O)
    All i/f/o columns & biases pre-scaled by 0.5 (tanh-based sigmoid).
    """
    BP_, _ = out_ref.shape
    SB = x_ref.shape[0]
    S = SB // BP_                       # = T + 1 fused wavefront steps
    H2 = wblk_ref.shape[0]              # 2H  (width of the [h1|h2] cat state)
    H6 = 3 * H2                         # 6H  (sigmoid-gate column span)

    # Hoisted input projection + biases for every wavefront step: one MXU push.
    addend_all = (jnp.dot(x_ref[...], wxin_ref[...],
                          preferred_element_type=jnp.float32)
                  + bwide_ref[...])                              # (S*BP, 8H)

    wblk = wblk_ref[...]

    h_cat = jnp.zeros((BP_, H2), jnp.float32)   # [h1(s-1) | h2(s-2)]
    c_cat = jnp.zeros((BP_, H2), jnp.float32)   # [c1(s-1) | c2(s-2)]

    for s in range(S):                           # static unroll (T+1 steps)
        g = addend_all[s * BP_:(s + 1) * BP_, :]                 # tile-aligned
        if s > 0:                                # s == 0: h_cat is zero
            g = g + jnp.dot(h_cat, wblk, preferred_element_type=jnp.float32)
        t_all = jnp.tanh(g)                      # ONE EUP pass, all 8 gate blocks
        sig = 0.5 * t_all[:, :H6] + 0.5          # i/f/o for both layers (VPU)
        i_cat = sig[:, :H2]                      # [i0 | i1]
        f_cat = sig[:, H2:2 * H2]                # [f0 | f1]
        o_cat = sig[:, 2 * H2:]                  # [o0 | o1]
        g_cat = t_all[:, H6:]                    # [g0 | g1]
        c_cat = f_cat * c_cat + i_cat * g_cat    # [c1(s) | c2(s-1)]
        h_cat = o_cat * jnp.tanh(c_cat)          # ONE EUP pass (BP, 2H)

    # fc: h1 rows of wfc are zero, so h_cat feeds the matmul directly.
    out_ref[...] = (jnp.dot(h_cat, wfc_ref[...],
                            preferred_element_type=jnp.float32)
                    + bfc_ref[...]).astype(out_ref.dtype)


def init_params(key, input_size, hidden_dim, output_size):
    """Deterministic param init (PyTorch-style U(-1/sqrt(H), 1/sqrt(H)))."""
    ks = jax.random.split(key, 13)
    k = 1.0 / jnp.sqrt(jnp.float32(hidden_dim))
    u = lambda kk, shape, bound: jax.random.uniform(
        kk, shape, jnp.float32, minval=-bound, maxval=bound)

    params = dict(
        # layer 0
        w_ih0=u(ks[0], (4 * hidden_dim, input_size), k),
        w_hh0=u(ks[1], (4 * hidden_dim, hidden_dim), k),
        b_ih0=u(ks[2], (4 * hidden_dim,), k),
        b_hh0=u(ks[3], (4 * hidden_dim,), k),
        # layer 1
        w_ih1=u(ks[4], (4 * hidden_dim, hidden_dim), k),
        w_hh1=u(ks[5], (4 * hidden_dim, hidden_dim), k),
        b_ih1=u(ks[6], (4 * hidden_dim,), k),
        b_hh1=u(ks[7], (4 * hidden_dim,), k),
        # fc
        w_fc=u(ks[8], (output_size, hidden_dim), k),
        b_fc=u(ks[9], (output_size,), k),
    )
    return params


def lstm_forward(x, params):
    """x: (B, T, I) float32 -> (B, OUTPUT_SIZE) float32."""
    B, T, I = x.shape
    H = params["w_hh0"].shape[1]
    O = params["w_fc"].shape[0]
    S = T + 1                                   # wavefront steps

    def perm(w):
        """PyTorch gate blocks [i, f, g, o] -> [i, f, o, g] along axis 0."""
        return jnp.concatenate([w[:2 * H], w[3 * H:], w[2 * H:3 * H]], axis=0)

    def scale_ifo(wt):
        """wt: (K, 4H) gate cols (i,f,o,g); scale i/f/o by 0.5 (tanh-sigmoid)."""
        return jnp.concatenate([0.5 * wt[:, :3 * H], wt[:, 3 * H:]], axis=1)

    wih0_t = scale_ifo(perm(params["w_ih0"]).T)                     # (I, 4H)
    whh0_t = scale_ifo(perm(params["w_hh0"]).T)                     # (H, 4H)
    wih1_t = scale_ifo(perm(params["w_ih1"]).T)                     # (H, 4H)
    whh1_t = scale_ifo(perm(params["w_hh1"]).T)                     # (H, 4H)
    b0 = scale_ifo(perm(params["b_ih0"] + params["b_hh0"]).reshape(1, 4 * H))
    b1 = scale_ifo(perm(params["b_ih1"] + params["b_hh1"]).reshape(1, 4 * H))

    def interleave_cols(w_l0, w_l1):
        """(K,4H)x(K,4H) -> (K,8H) with column blocks (i0,i1,f0,f1,o0,o1,g0,g1)."""
        blocks = []
        for g in range(4):
            blocks.append(w_l0[:, g * H:(g + 1) * H])
            blocks.append(w_l1[:, g * H:(g + 1) * H])
        return jnp.concatenate(blocks, axis=1)

    zI = jnp.zeros((I, 4 * H), jnp.float32)
    zH = jnp.zeros((H, 4 * H), jnp.float32)
    z1 = jnp.zeros((1, 4 * H), jnp.float32)

    # Hoisted projection weight: rows 0..I-1 carry x into the layer-0 columns;
    # the extra row I (driven by the "ones" feature) carries b1 into layer-1.
    wxin = jnp.concatenate([interleave_cols(wih0_t, zI),
                            interleave_cols(z1, b1)], axis=0)       # (I+1, 8H)
    b_wide = interleave_cols(b0, z1)                                 # (1, 8H)

    # Fused recurrent block weight: rows [0:H] multiply h1, rows [H:2H] h2.
    wblk = jnp.concatenate([interleave_cols(whh0_t, wih1_t),
                            interleave_cols(zH, whh1_t)], axis=0)    # (2H, 8H)

    # fc weight padded so it consumes the full [h1|h2] cat state directly.
    wfc_wide = jnp.concatenate([jnp.zeros((H, O), jnp.float32),
                                params["w_fc"].T.astype(jnp.float32)], axis=0)
    bfc = params["b_fc"].reshape(1, O).astype(jnp.float32)

    # x -> time-major, batch padded to BP sublanes, one extra (zero) wavefront
    # step, and a "ones" feature column that is 0 at step 0 and 1 afterwards.
    x_tm = jnp.transpose(x, (1, 0, 2)).astype(jnp.float32)           # (T, B, I)
    x_pad = jnp.zeros((S, BP, I + 1), jnp.float32)
    x_pad = x_pad.at[:T, :B, :I].set(x_tm)
    x_pad = x_pad.at[1:, :, I].set(1.0)
    x_aug = x_pad.reshape(S * BP, I + 1)                             # (S*BP, I+1)

    vmem = pl.BlockSpec(memory_space=pltpu.MemorySpace.VMEM)
    out = pl.pallas_call(
        lstm2_fc_kernel,
        out_shape=jax.ShapeDtypeStruct((BP, O), jnp.float32),
        in_specs=[vmem] * 6,
        out_specs=vmem,
    )(x_aug, wxin, b_wide, wblk, wfc_wide, bfc)
    # TODO(synk): for large batch on v7x, add a batch grid axis with
    # dimension_semantics=("parallel",) so both TensorCores are used, and pad
    # O to a lane-dense multiple of 128 for unmasked stores.
    return out[:B]


def lstm_forward_ref(x, params):
    """Pure-JAX reference (PyTorch gate order / op order) for correctness."""
    B, T, I = x.shape
    H = params["w_hh0"].shape[1]

    def cell(x_t, h, c, w_ih, w_hh, b_ih, b_hh):
        g = x_t @ w_ih.T + b_ih + h @ w_hh.T + b_hh
        i_g = jax.nn.sigmoid(g[:, 0 * H:1 * H])
        f_g = jax.nn.sigmoid(g[:, 1 * H:2 * H])
        g_g = jnp.tanh(g[:, 2 * H:3 * H])
        o_g = jax.nn.sigmoid(g[:, 3 * H:4 * H])
        c = f_g * c + i_g * g_g
        h = o_g * jnp.tanh(c)
        return h, c

    h1 = c1 = h2 = c2 = jnp.zeros((B, H), jnp.float32)
    for t in range(T):
        x_t = x[:, t, :]
        h1, c1 = cell(x_t, h1, c1, params["w_ih0"], params["w_hh0"],
                      params["b_ih0"], params["b_hh0"])
        h2, c2 = cell(h1, h2, c2, params["w_ih1"], params["w_hh1"],
                      params["b_ih1"], params["b_hh1"])
    return h2 @ params["w_fc"].T + params["b_fc"]


if __name__ == "__main__":
    key = jax.random.PRNGKey(0)
    kx, kp = jax.random.split(key)

    x = jax.random.normal(kx, (BATCH, SEQ, INPUT_SIZE), jnp.float32)
    params = init_params(kp, INPUT_SIZE, HIDDEN_DIM, OUTPUT_SIZE)

    out = lstm_forward(x, params)
    out = jax.block_until_ready(out)

    ref = lstm_forward_ref(x, params)
    assert out.shape == (BATCH, OUTPUT_SIZE), out.shape
    assert jnp.allclose(out, ref, rtol=1e-4, atol=1e-4), (
        f"max abs err {jnp.max(jnp.abs(out - ref))}")

    print("KERNEL_OK")
</pallas_src>

<mosaic_0001>
module attributes {stable_mosaic.version = 11 : i64} {
  func.func @lstm2_fc_kernel(%arg0: memref<72x29xf32, #tpu.memory_space<vmem>>, %arg1: memref<29x256xf32, #tpu.memory_space<vmem>>, %arg2: memref<1x256xf32, #tpu.memory_space<vmem>>, %arg3: memref<64x256xf32, #tpu.memory_space<vmem>>, %arg4: memref<64x10xf32, #tpu.memory_space<vmem>>, %arg5: memref<1x10xf32, #tpu.memory_space<vmem>>, %arg6: memref<8x10xf32, #tpu.memory_space<vmem>>) attributes {dimension_semantics = [], scalar_prefetch = 0 : i64, scratch_operands = 0 : i64, tpu.core_type = #tpu.core_type<tc>} {
    %c0 = arith.constant 0 : index
    %c0_0 = arith.constant 0 : index
    %0 = vector.load %arg0[%c0, %c0_0] : memref<72x29xf32, #tpu.memory_space<vmem>>, vector<72x29xf32>
    %c0_1 = arith.constant 0 : index
    %c0_2 = arith.constant 0 : index
    %1 = vector.load %arg1[%c0_1, %c0_2] : memref<29x256xf32, #tpu.memory_space<vmem>>, vector<29x256xf32>
    %cst = arith.constant dense<0.000000e+00> : vector<72x256xf32>
    %2 = tpu.matmul %0, %1, %cst {dimension_numbers = #tpu.dot_dimension_numbers<[1], [0], [0], [1], [0, 0, 1, 1], [], []>} : vector<72x29xf32>, vector<29x256xf32>, vector<72x256xf32> -> vector<72x256xf32>
    %c0_3 = arith.constant 0 : index
    %c0_4 = arith.constant 0 : index
    %3 = vector.load %arg2[%c0_3, %c0_4] : memref<1x256xf32, #tpu.memory_space<vmem>>, vector<1x256xf32>
    %4 = vector.broadcast %3 : vector<1x256xf32> to vector<72x256xf32>
    %5 = arith.addf %2, %4 : vector<72x256xf32>
    %c0_5 = arith.constant 0 : index
    %c0_6 = arith.constant 0 : index
    %6 = vector.load %arg3[%c0_5, %c0_6] : memref<64x256xf32, #tpu.memory_space<vmem>>, vector<64x256xf32>
    %cst_7 = arith.constant 0.000000e+00 : f32
    %7 = vector.broadcast %cst_7 : f32 to vector<8x64xf32>
    %8 = vector.extract_strided_slice %5 {offsets = [0, 0], sizes = [8, 256], strides = [1, 1]} : vector<72x256xf32> to vector<8x256xf32>
    %9 = math.tanh %8 : vector<8x256xf32>
    %10 = vector.extract_strided_slice %9 {offsets = [0, 0], sizes = [8, 192], strides = [1, 1]} : vector<8x256xf32> to vector<8x192xf32>
    %cst_8 = arith.constant 5.000000e-01 : f32
    %11 = vector.broadcast %cst_8 : f32 to vector<8x192xf32>
    %12 = arith.mulf %11, %10 : vector<8x192xf32>
    %cst_9 = arith.constant 5.000000e-01 : f32
    %13 = vector.broadcast %cst_9 : f32 to vector<8x192xf32>
    %14 = arith.addf %12, %13 : vector<8x192xf32>
    %15 = vector.extract_strided_slice %14 {offsets = [0, 0], sizes = [8, 64], strides = [1, 1]} : vector<8x192xf32> to vector<8x64xf32>
    %16 = vector.extract_strided_slice %14 {offsets = [0, 64], sizes = [8, 64], strides = [1, 1]} : vector<8x192xf32> to vector<8x64xf32>
    %17 = vector.extract_strided_slice %14 {offsets = [0, 128], sizes = [8, 64], strides = [1, 1]} : vector<8x192xf32> to vector<8x64xf32>
    %18 = vector.extract_strided_slice %9 {offsets = [0, 192], sizes = [8, 64], strides = [1, 1]} : vector<8x256xf32> to vector<8x64xf32>
    %19 = arith.mulf %16, %7 : vector<8x64xf32>
    %20 = arith.mulf %15, %18 : vector<8x64xf32>
    %21 = arith.addf %19, %20 : vector<8x64xf32>
    %22 = math.tanh %21 : vector<8x64xf32>
    %23 = arith.mulf %17, %22 : vector<8x64xf32>
    %24 = vector.extract_strided_slice %5 {offsets = [8, 0], sizes = [8, 256], strides = [1, 1]} : vector<72x256xf32> to vector<8x256xf32>
    %cst_10 = arith.constant dense<0.000000e+00> : vector<8x256xf32>
    %25 = tpu.matmul %23, %6, %cst_10 {dimension_numbers = #tpu.dot_dimension_numbers<[1], [0], [0], [1], [0, 0, 1, 1], [], []>} : vector<8x64xf32>, vector<64x256xf32>, vector<8x256xf32> -> vector<8x256xf32>
    %26 = arith.addf %24, %25 : vector<8x256xf32>
    %27 = math.tanh %26 : vector<8x256xf32>
    %28 = vector.extract_strided_slice %27 {offsets = [0, 0], sizes = [8, 192], strides = [1, 1]} : vector<8x256xf32> to vector<8x192xf32>
    %cst_11 = arith.constant 5.000000e-01 : f32
    %29 = vector.broadcast %cst_11 : f32 to vector<8x192xf32>
    %30 = arith.mulf %29, %28 : vector<8x192xf32>
    %cst_12 = arith.constant 5.000000e-01 : f32
    %31 = vector.broadcast %cst_12 : f32 to vector<8x192xf32>
    %32 = arith.addf %30, %31 : vector<8x192xf32>
    %33 = vector.extract_strided_slice %32 {offsets = [0, 0], sizes = [8, 64], strides = [1, 1]} : vector<8x192xf32> to vector<8x64xf32>
    %34 = vector.extract_strided_slice %32 {offsets = [0, 64], sizes = [8, 64], strides = [1, 1]} : vector<8x192xf32> to vector<8x64xf32>
    %35 = vector.extract_strided_slice %32 {offsets = [0, 128], sizes = [8, 64], strides = [1, 1]} : vector<8x192xf32> to vector<8x64xf32>
    %36 = vector.extract_strided_slice %27 {offsets = [0, 192], sizes = [8, 64], strides = [1, 1]} : vector<8x256xf32> to vector<8x64xf32>
    %37 = arith.mulf %34, %21 : vector<8x64xf32>
    %38 = arith.mulf %33, %36 : vector<8x64xf32>
    %39 = arith.addf %37, %38 : vector<8x64xf32>
    %40 = math.tanh %39 : vector<8x64xf32>
    %41 = arith.mulf %35, %40 : vector<8x64xf32>
    %42 = vector.extract_strided_slice %5 {offsets = [16, 0], sizes = [8, 256], strides = [1, 1]} : vector<72x256xf32> to vector<8x256xf32>
    %cst_13 = arith.constant dense<0.000000e+00> : vector<8x256xf32>
    %43 = tpu.matmul %41, %6, %cst_13 {dimension_numbers = #tpu.dot_dimension_numbers<[1], [0], [0], [1], [0, 0, 1, 1], [], []>} : vector<8x64xf32>, vector<64x256xf32>, vector<8x256xf32> -> vector<8x256xf32>
    %44 = arith.addf %42, %43 : vector<8x256xf32>
    %45 = math.tanh %44 : vector<8x256xf32>
    %46 = vector.extract_strided_slice %45 {offsets = [0, 0], sizes = [8, 192], strides = [1, 1]} : vector<8x256xf32> to vector<8x192xf32>
    %cst_14 = arith.constant 5.000000e-01 : f32
    %47 = vector.broadcast %cst_14 : f32 to vector<8x192xf32>
    %48 = arith.mulf %47, %46 : vector<8x192xf32>
    %cst_15 = arith.constant 5.000000e-01 : f32
    %49 = vector.broadcast %cst_15 : f32 to vector<8x192xf32>
    %50 = arith.addf %48, %49 : vector<8x192xf32>
    %51 = vector.extract_strided_slice %50 {offsets = [0, 0], sizes = [8, 64], strides = [1, 1]} : vector<8x192xf32> to vector<8x64xf32>
    %52 = vector.extract_strided_slice %50 {offsets = [0, 64], sizes = [8, 64], strides = [1, 1]} : vector<8x192xf32> to vector<8x64xf32>
    %53 = vector.extract_strided_slice %50 {offsets = [0, 128], sizes = [8, 64], strides = [1, 1]} : vector<8x192xf32> to vector<8x64xf32>
    %54 = vector.extract_strided_slice %45 {offsets = [0, 192], sizes = [8, 64], strides = [1, 1]} : vector<8x256xf32> to vector<8x64xf32>
    %55 = arith.mulf %52, %39 : vector<8x64xf32>
    %56 = arith.mulf %51, %54 : vector<8x64xf32>
    %57 = arith.addf %55, %56 : vector<8x64xf32>
    %58 = math.tanh %57 : vector<8x64xf32>
    %59 = arith.mulf %53, %58 : vector<8x64xf32>
    %60 = vector.extract_strided_slice %5 {offsets = [24, 0], sizes = [8, 256], strides = [1, 1]} : vector<72x256xf32> to vector<8x256xf32>
    %cst_16 = arith.constant dense<0.000000e+00> : vector<8x256xf32>
    %61 = tpu.matmul %59, %6, %cst_16 {dimension_numbers = #tpu.dot_dimension_numbers<[1], [0], [0], [1], [0, 0, 1, 1], [], []>} : vector<8x64xf32>, vector<64x256xf32>, vector<8x256xf32> -> vector<8x256xf32>
    %62 = arith.addf %60, %61 : vector<8x256xf32>
    %63 = math.tanh %62 : vector<8x256xf32>
    %64 = vector.extract_strided_slice %63 {offsets = [0, 0], sizes = [8, 192], strides = [1, 1]} : vector<8x256xf32> to vector<8x192xf32>
    %cst_17 = arith.constant 5.000000e-01 : f32
    %65 = vector.broadcast %cst_17 : f32 to vector<8x192xf32>
    %66 = arith.mulf %65, %64 : vector<8x192xf32>
    %cst_18 = arith.constant 5.000000e-01 : f32
    %67 = vector.broadcast %cst_18 : f32 to vector<8x192xf32>
    %68 = arith.addf %66, %67 : vector<8x192xf32>
    %69 = vector.extract_strided_slice %68 {offsets = [0, 0], sizes = [8, 64], strides = [1, 1]} : vector<8x192xf32> to vector<8x64xf32>
    %70 = vector.extract_strided_slice %68 {offsets = [0, 64], sizes = [8, 64], strides = [1, 1]} : vector<8x192xf32> to vector<8x64xf32>
    %71 = vector.extract_strided_slice %68 {offsets = [0, 128], sizes = [8, 64], strides = [1, 1]} : vector<8x192xf32> to vector<8x64xf32>
    %72 = vector.extract_strided_slice %63 {offsets = [0, 192], sizes = [8, 64], strides = [1, 1]} : vector<8x256xf32> to vector<8x64xf32>
    %73 = arith.mulf %70, %57 : vector<8x64xf32>
    %74 = arith.mulf %69, %72 : vector<8x64xf32>
    %75 = arith.addf %73, %74 : vector<8x64xf32>
    %76 = math.tanh %75 : vector<8x64xf32>
    %77 = arith.mulf %71, %76 : vector<8x64xf32>
    %78 = vector.extract_strided_slice %5 {offsets = [32, 0], sizes = [8, 256], strides = [1, 1]} : vector<72x256xf32> to vector<8x256xf32>
    %cst_19 = arith.constant dense<0.000000e+00> : vector<8x256xf32>
    %79 = tpu.matmul %77, %6, %cst_19 {dimension_numbers = #tpu.dot_dimension_numbers<[1], [0], [0], [1], [0, 0, 1, 1], [], []>} : vector<8x64xf32>, vector<64x256xf32>, vector<8x256xf32> -> vector<8x256xf32>
    %80 = arith.addf %78, %79 : vector<8x256xf32>
    %81 = math.tanh %80 : vector<8x256xf32>
    %82 = vector.extract_strided_slice %81 {offsets = [0, 0], sizes = [8, 192], strides = [1, 1]} : vector<8x256xf32> to vector<8x192xf32>
    %cst_20 = arith.constant 5.000000e-01 : f32
    %83 = vector.broadcast %cst_20 : f32 to vector<8x192xf32>
    %84 = arith.mulf %83, %82 : vector<8x192xf32>
    %cst_21 = arith.constant 5.000000e-01 : f32
    %85 = vector.broadcast %cst_21 : f32 to vector<8x192xf32>
    %86 = arith.addf %84, %85 : vector<8x192xf32>
    %87 = vector.extract_strided_slice %86 {offsets = [0, 0], sizes = [8, 64], strides = [1, 1]} : vector<8x192xf32> to vector<8x64xf32>
    %88 = vector.extract_strided_slice %86 {offsets = [0, 64], sizes = [8, 64], strides = [1, 1]} : vector<8x192xf32> to vector<8x64xf32>
    %89 = vector.extract_strided_slice %86 {offsets = [0, 128], sizes = [8, 64], strides = [1, 1]} : vector<8x192xf32> to vector<8x64xf32>
    %90 = vector.extract_strided_slice %81 {offsets = [0, 192], sizes = [8, 64], strides = [1, 1]} : vector<8x256xf32> to vector<8x64xf32>
    %91 = arith.mulf %88, %75 : vector<8x64xf32>
    %92 = arith.mulf %87, %90 : vector<8x64xf32>
    %93 = arith.addf %91, %92 : vector<8x64xf32>
    %94 = math.tanh %93 : vector<8x64xf32>
    %95 = arith.mulf %89, %94 : vector<8x64xf32>
    %96 = vector.extract_strided_slice %5 {offsets = [40, 0], sizes = [8, 256], strides = [1, 1]} : vector<72x256xf32> to vector<8x256xf32>
    %cst_22 = arith.constant dense<0.000000e+00> : vector<8x256xf32>
    %97 = tpu.matmul %95, %6, %cst_22 {dimension_numbers = #tpu.dot_dimension_numbers<[1], [0], [0], [1], [0, 0, 1, 1], [], []>} : vector<8x64xf32>, vector<64x256xf32>, vector<8x256xf32> -> vector<8x256xf32>
    %98 = arith.addf %96, %97 : vector<8x256xf32>
    %99 = math.tanh %98 : vector<8x256xf32>
    %100 = vector.extract_strided_slice %99 {offsets = [0, 0], sizes = [8, 192], strides = [1, 1]} : vector<8x256xf32> to vector<8x192xf32>
    %cst_23 = arith.constant 5.000000e-01 : f32
    %101 = vector.broadcast %cst_23 : f32 to vector<8x192xf32>
    %102 = arith.mulf %101, %100 : vector<8x192xf32>
    %cst_24 = arith.constant 5.000000e-01 : f32
    %103 = vector.broadcast %cst_24 : f32 to vector<8x192xf32>
    %104 = arith.addf %102, %103 : vector<8x192xf32>
    %105 = vector.extract_strided_slice %104 {offsets = [0, 0], sizes = [8, 64], strides = [1, 1]} : vector<8x192xf32> to vector<8x64xf32>
    %106 = vector.extract_strided_slice %104 {offsets = [0, 64], sizes = [8, 64], strides = [1, 1]} : vector<8x192xf32> to vector<8x64xf32>
    %107 = vector.extract_strided_slice %104 {offsets = [0, 128], sizes = [8, 64], strides = [1, 1]} : vector<8x192xf32> to vector<8x64xf32>
    %108 = vector.extract_strided_slice %99 {offsets = [0, 192], sizes = [8, 64], strides = [1, 1]} : vector<8x256xf32> to vector<8x64xf32>
    %109 = arith.mulf %106, %93 : vector<8x64xf32>
    %110 = arith.mulf %105, %108 : vector<8x64xf32>
    %111 = arith.addf %109, %110 : vector<8x64xf32>
    %112 = math.tanh %111 : vector<8x64xf32>
    %113 = arith.mulf %107, %112 : vector<8x64xf32>
    %114 = vector.extract_strided_slice %5 {offsets = [48, 0], sizes = [8, 256], strides = [1, 1]} : vector<72x256xf32> to vector<8x256xf32>
    %cst_25 = arith.constant dense<0.000000e+00> : vector<8x256xf32>
    %115 = tpu.matmul %113, %6, %cst_25 {dimension_numbers = #tpu.dot_dimension_numbers<[1], [0], [0], [1], [0, 0, 1, 1], [], []>} : vector<8x64xf32>, vector<64x256xf32>, vector<8x256xf32> -> vector<8x256xf32>
    %116 = arith.addf %114, %115 : vector<8x256xf32>
    %117 = math.tanh %116 : vector<8x256xf32>
    %118 = vector.extract_strided_slice %117 {offsets = [0, 0], sizes = [8, 192], strides = [1, 1]} : vector<8x256xf32> to vector<8x192xf32>
    %cst_26 = arith.constant 5.000000e-01 : f32
    %119 = vector.broadcast %cst_26 : f32 to vector<8x192xf32>
    %120 = arith.mulf %119, %118 : vector<8x192xf32>
    %cst_27 = arith.constant 5.000000e-01 : f32
    %121 = vector.broadcast %cst_27 : f32 to vector<8x192xf32>
    %122 = arith.addf %120, %121 : vector<8x192xf32>
    %123 = vector.extract_strided_slice %122 {offsets = [0, 0], sizes = [8, 64], strides = [1, 1]} : vector<8x192xf32> to vector<8x64xf32>
    %124 = vector.extract_strided_slice %122 {offsets = [0, 64], sizes = [8, 64], strides = [1, 1]} : vector<8x192xf32> to vector<8x64xf32>
    %125 = vector.extract_strided_slice %122 {offsets = [0, 128], sizes = [8, 64], strides = [1, 1]} : vector<8x192xf32> to vector<8x64xf32>
    %126 = vector.extract_strided_slice %117 {offsets = [0, 192], sizes = [8, 64], strides = [1, 1]} : vector<8x256xf32> to vector<8x64xf32>
    %127 = arith.mulf %124, %111 : vector<8x64xf32>
    %128 = arith.mulf %123, %126 : vector<8x64xf32>
    %129 = arith.addf %127, %128 : vector<8x64xf32>
    %130 = math.tanh %129 : vector<8x64xf32>
    %131 = arith.mulf %125, %130 : vector<8x64xf32>
    %132 = vector.extract_strided_slice %5 {offsets = [56, 0], sizes = [8, 256], strides = [1, 1]} : vector<72x256xf32> to vector<8x256xf32>
    %cst_28 = arith.constant dense<0.000000e+00> : vector<8x256xf32>
    %133 = tpu.matmul %131, %6, %cst_28 {dimension_numbers = #tpu.dot_dimension_numbers<[1], [0], [0], [1], [0, 0, 1, 1], [], []>} : vector<8x64xf32>, vector<64x256xf32>, vector<8x256xf32> -> vector<8x256xf32>
    %134 = arith.addf %132, %133 : vector<8x256xf32>
    %135 = math.tanh %134 : vector<8x256xf32>
    %136 = vector.extract_strided_slice %135 {offsets = [0, 0], sizes = [8, 192], strides = [1, 1]} : vector<8x256xf32> to vector<8x192xf32>
    %cst_29 = arith.constant 5.000000e-01 : f32
    %137 = vector.broadcast %cst_29 : f32 to vector<8x192xf32>
    %138 = arith.mulf %137, %136 : vector<8x192xf32>
    %cst_30 = arith.constant 5.000000e-01 : f32
    %139 = vector.broadcast %cst_30 : f32 to vector<8x192xf32>
    %140 = arith.addf %138, %139 : vector<8x192xf32>
    %141 = vector.extract_strided_slice %140 {offsets = [0, 0], sizes = [8, 64], strides = [1, 1]} : vector<8x192xf32> to vector<8x64xf32>
    %142 = vector.extract_strided_slice %140 {offsets = [0, 64], sizes = [8, 64], strides = [1, 1]} : vector<8x192xf32> to vector<8x64xf32>
    %143 = vector.extract_strided_slice %140 {offsets = [0, 128], sizes = [8, 64], strides = [1, 1]} : vector<8x192xf32> to vector<8x64xf32>
    %144 = vector.extract_strided_slice %135 {offsets = [0, 192], sizes = [8, 64], strides = [1, 1]} : vector<8x256xf32> to vector<8x64xf32>
    %145 = arith.mulf %142, %129 : vector<8x64xf32>
    %146 = arith.mulf %141, %144 : vector<8x64xf32>
    %147 = arith.addf %145, %146 : vector<8x64xf32>
    %148 = math.tanh %147 : vector<8x64xf32>
    %149 = arith.mulf %143, %148 : vector<8x64xf32>
    %150 = vector.extract_strided_slice %5 {offsets = [64, 0], sizes = [8, 256], strides = [1, 1]} : vector<72x256xf32> to vector<8x256xf32>
    %cst_31 = arith.constant dense<0.000000e+00> : vector<8x256xf32>
    %151 = tpu.matmul %149, %6, %cst_31 {dimension_numbers = #tpu.dot_dimension_numbers<[1], [0], [0], [1], [0, 0, 1, 1], [], []>} : vector<8x64xf32>, vector<64x256xf32>, vector<8x256xf32> -> vector<8x256xf32>
    %152 = arith.addf %150, %151 : vector<8x256xf32>
    %153 = math.tanh %152 : vector<8x256xf32>
    %154 = vector.extract_strided_slice %153 {offsets = [0, 0], sizes = [8, 192], strides = [1, 1]} : vector<8x256xf32> to vector<8x192xf32>
    %cst_32 = arith.constant 5.000000e-01 : f32
    %155 = vector.broadcast %cst_32 : f32 to vector<8x192xf32>
    %156 = arith.mulf %155, %154 : vector<8x192xf32>
    %cst_33 = arith.constant 5.000000e-01 : f32
    %157 = vector.broadcast %cst_33 : f32 to vector<8x192xf32>
    %158 = arith.addf %156, %157 : vector<8x192xf32>
    %159 = vector.extract_strided_slice %158 {offsets = [0, 0], sizes = [8, 64], strides = [1, 1]} : vector<8x192xf32> to vector<8x64xf32>
    %160 = vector.extract_strided_slice %158 {offsets = [0, 64], sizes = [8, 64], strides = [1, 1]} : vector<8x192xf32> to vector<8x64xf32>
    %161 = vector.extract_strided_slice %158 {offsets = [0, 128], sizes = [8, 64], strides = [1, 1]} : vector<8x192xf32> to vector<8x64xf32>
    %162 = vector.extract_strided_slice %153 {offsets = [0, 192], sizes = [8, 64], strides = [1, 1]} : vector<8x256xf32> to vector<8x64xf32>
    %163 = arith.mulf %160, %147 : vector<8x64xf32>
    %164 = arith.mulf %159, %162 : vector<8x64xf32>
    %165 = arith.addf %163, %164 : vector<8x64xf32>
    %166 = math.tanh %165 : vector<8x64xf32>
    %167 = arith.mulf %161, %166 : vector<8x64xf32>
    %c0_34 = arith.constant 0 : index
    %c0_35 = arith.constant 0 : index
    %168 = vector.load %arg4[%c0_34, %c0_35] : memref<64x10xf32, #tpu.memory_space<vmem>>, vector<64x10xf32>
    %cst_36 = arith.constant dense<0.000000e+00> : vector<8x10xf32>
    %169 = tpu.matmul %167, %168, %cst_36 {dimension_numbers = #tpu.dot_dimension_numbers<[1], [0], [0], [1], [0, 0, 1, 1], [], []>} : vector<8x64xf32>, vector<64x10xf32>, vector<8x10xf32> -> vector<8x10xf32>
    %c0_37 = arith.constant 0 : index
    %c0_38 = arith.constant 0 : index
    %170 = vector.load %arg5[%c0_37, %c0_38] : memref<1x10xf32, #tpu.memory_space<vmem>>, vector<1x10xf32>
    %171 = vector.broadcast %170 : vector<1x10xf32> to vector<8x10xf32>
    %172 = arith.addf %169, %171 : vector<8x10xf32>
    %c0_39 = arith.constant 0 : index
    %c0_40 = arith.constant 0 : index
    %173 = vector.load %arg6[%c0_39, %c0_40] : memref<8x10xf32, #tpu.memory_space<vmem>>, vector<8x10xf32>
    tpu.vector_store %arg6[%c0_39, %c0_40], %172 {strides = array<i32>} : memref<8x10xf32, #tpu.memory_space<vmem>>, vector<8x10xf32>,
    return
  }
}

</mosaic_0001>

<llo_original>
// kernel: tpu_custom_call.1
$region0: #{tpu_custom_call.1}
  #allocation0 [shape = 'u32[]', space=smem, size = 0x4, offset = 0x4, fixed_abs, tag = 'smem constant byte address 0x4 - core index']
  #allocation1 [shape = 'u32[144,128]{1,0:T(1,128)}', space=vmem, size = 0x12000, scoped, tag = 'internal scratch']
  %s0 = inlined_call_operand.vmem [shape: f32[72,29], index: 0, kind: input, shape index: {}]
  %s1 = inlined_call_operand.hbm [shape: f32[29,256], index: 1, kind: input, shape index: {}]
  %s2 = inlined_call_operand.vmem [shape: f32[1,256], index: 2, kind: input, shape index: {}]
  %s3 = inlined_call_operand.vmem [shape: f32[64,256], index: 3, kind: input, shape index: {}]
  %s4 = inlined_call_operand.vmem [shape: f32[64,10], index: 4, kind: input, shape index: {}]
  %s5 = inlined_call_operand.vmem [shape: f32[1,10], index: 5, kind: input, shape index: {}]
  %s6 = inlined_call_operand.hbm [shape: f32[8,10], index: 6, kind: output, shape index: {}]
  %s7 = sld [smem:[#allocation0]]
  $region38: #{tpu_custom_call.1} parent=0
    _
  %s9 = ssub.s32 1, %s7
  %s10 = scalar_select 0, %s9, %s7
  $region1: #{tpu_custom_call.1} parent=0
    #allocation2 [shape = 'u8[32768]{0}', space=vmem, size = 0x8000, scoped, tag = 'input window, operand 1, single buffered']
    #allocation3 [shape = 's32[1]{0}', space=sflag, size = 0x4, scoped, tag = 'scoped memory for tpu_custom_call.1']
    #allocation4 [shape = 's32[1]{0}', space=sflag, size = 0x4, scoped, tag = 'scoped memory for tpu_custom_call.1']
    #allocation5 [shape = 'u8[4096]{0}', space=vmem, size = 0x1000, scoped, tag = 'output window, operand 0, single buffered']
    %11 = vsyncpa [#allocation3], 0
    %12 = vsyncpa [#allocation4], 0
    // Predicated region
    $region2: #{tpu_custom_call.1} parent=1 // pred_check
      _
    $region3: #{tpu_custom_call.1} parent=1 // pred_check_branch
      %14 = sbr.rel (0) target = $region5
    $region4: #{tpu_custom_call.1} parent=1 // pred_region
      _
    $region5: #{tpu_custom_call.1} parent=1 // pred_fallthru
      _
    // Predicated region
    $region6: #{tpu_custom_call.1} parent=1 // pred_check
      _
    $region7: #{tpu_custom_call.1} parent=1 // pred_check_branch
      %16 = sbr.rel (0) target = $region9
    $region8: #{tpu_custom_call.1} parent=1 // pred_region
      %s18 = ssub.s32 1024, 1024
      %19 = vsyncadd [#allocation3], %s18
      %s20 = sshll.u32 [#allocation2], 4
      %s21 = int_to_ptr.vmem [resolvable:$true] %s20
      %26 = dma.hbm_to_vmem [thread:$0]  %s1, 1024, %s21, [#allocation3], 256, 256, 16
    $region9: #{tpu_custom_call.1} parent=1 // pred_fallthru
      _
    // Predicated region
    $region10: #{tpu_custom_call.1} parent=1 // pred_check
      _
    $region11: #{tpu_custom_call.1} parent=1 // pred_check_branch
      %28 = sbr.rel (0) target = $region13
    $region12: #{tpu_custom_call.1} parent=1 // pred_region
      _
    $region13: #{tpu_custom_call.1} parent=1 // pred_fallthru
      _
    // Predicated region
    $region14: #{tpu_custom_call.1} parent=1 // pred_check
      _
    $region15: #{tpu_custom_call.1} parent=1 // pred_check_branch
      %30 = sbr.rel (0) target = $region17
    $region16: #{tpu_custom_call.1} parent=1 // pred_region
      _
    $region17: #{tpu_custom_call.1} parent=1 // pred_fallthru
      _
    // Predicated region
    $region18: #{tpu_custom_call.1} parent=1 // pred_check
      _
    $region19: #{tpu_custom_call.1} parent=1 // pred_check_branch
      %32 = sbr.rel (0) target = $region21
    $region20: #{tpu_custom_call.1} parent=1 // pred_region
      _
    $region21: #{tpu_custom_call.1} parent=1 // pred_fallthru
      _
    // Predicated region
    $region22: #{tpu_custom_call.1} parent=1 // pred_check
      _
    $region23: #{tpu_custom_call.1} parent=1 // pred_check_branch
      %34 = sbr.rel (0) target = $region25
    $region24: #{tpu_custom_call.1} parent=1 // pred_region
      _
    $region25: #{tpu_custom_call.1} parent=1 // pred_fallthru
      _
    // Predicated region
    $region26: #{tpu_custom_call.1} parent=1 // pred_check
      _
    $region27: #{tpu_custom_call.1} parent=1 // pred_check_branch
      %36 = sbr.rel (0) target = $region29
    $region28: #{tpu_custom_call.1} parent=1 // pred_region
      %37 = dma.done [#allocation3], 1024
    $region29: #{tpu_custom_call.1} parent=1 // pred_fallthru
      _
    %v38 = vld [vmem:[%s0] sm:$0xff]
    %v39 = vld [vmem:[%s0 + $0x8] sm:$0xff]
    %v40 = vld [vmem:[%s0 + $0x10] sm:$0xff]
    %v41 = vld [vmem:[%s0 + $0x18] sm:$0xff]
    %v42 = vld [vmem:[%s0 + $0x20] sm:$0xff]
    %v43 = vld [vmem:[%s0 + $0x28] sm:$0xff]
    %v44 = vld [vmem:[%s0 + $0x30] sm:$0xff]
    %v45 = vld [vmem:[%s0 + $0x38] sm:$0xff]
    %v46 = vld [vmem:[%s0 + $0x40] sm:$0xff]
    %v47 = vld [vmem:[#allocation2] sm:$0xff]
    %v48 = vld [vmem:[#allocation2 + $0x8] sm:$0xff]
    %v49 = vld [vmem:[#allocation2 + $0x10] sm:$0xff]
    %v50 = vld [vmem:[#allocation2 + $0x18] sm:$0xff]
    %v51 = vld [vmem:[#allocation2 + $0x20] sm:$0xff]
    %v52 = vld [vmem:[#allocation2 + $0x28] sm:$0xff]
    %v53 = vld [vmem:[#allocation2 + $0x30] sm:$0x1f]
    %v54 = vld [vmem:[#allocation2 + $0x38] sm:$0x1f]
    %v55 = vld [vmem:[%s2] sm:$0x3]
    %v57 = vlaneseq
    %v58 = vshrl.u32 %v57, 7
    %v59 = vsub.s32 0, %v58
    %v60 = vrot.slane %v55, %v59
    %v61 = vlaneseq
    %v62 = vshrl.u32 %v61, 7
    %v63 = vsub.s32 1, %v62
    %v64 = vrot.slane %v55, %v63
    %vm67 = vcmask 236544
    %v69 = vsel %vm67, %v38, 0
    %v72 = vsel %vm67, %v39, 0
    %v75 = vsel %vm67, %v40, 0
    %v78 = vsel %vm67, %v41, 0
    %v81 = vsel %vm67, %v42, 0
    %v84 = vsel %vm67, %v43, 0
    %v87 = vsel %vm67, %v44, 0
    %v90 = vsel %vm67, %v45, 0
    %v93 = vsel %vm67, %v46, 0
    %vm95 = vcmask 1044480
    %v97 = vsel %vm95, %v53, 0
    %v100 = vsel %vm95, %v54, 0
    %102 = vmatprep.subr.mxu0 0.0
    %103 = vmatpush1.msra.mxu0 0.0
    %104 = vmatprep.subr.mxu0 0.0
    %105 = vmatpush1.msra.mxu0 0.0
    %106 = vmatprep.subr.mxu0 0.0
    %107 = vmatpush1.msra.mxu0 0.0
    %108 = vmatprep.subr.mxu0 0.0
    %109 = vmatpush1.msra.mxu0 0.0
    %110 = vmatprep.subr.mxu0 0.0
    %111 = vmatpush1.msra.mxu0 0.0
    %112 = vmatprep.subr.mxu0 0.0
    %113 = vmatpush1.msra.mxu0 0.0
    %114 = vmatprep.subr.mxu0 0.0
    %115 = vmatpush1.msra.mxu0 0.0
    %116 = vmatprep.subr.mxu0 0.0
    %117 = vmatpush1.msra.mxu0 0.0
    %118 = vmatprep.subr.mxu0 0.0
    %119 = vmatpush1.msra.mxu0 0.0
    %120 = vmatprep.subr.mxu0 0.0
    %121 = vmatpush1.msra.mxu0 0.0
    %122 = vmatprep.subr.mxu0 0.0
    %123 = vmatpush1.msra.mxu0 0.0
    %124 = vmatprep.subr.mxu0 0.0
    %125 = vmatpush1.msra.mxu0 0.0
    %126 = vmatprep.subr.mxu0 %v100
    %127 = vmatpush1.msra.mxu0 %v97
    %128 = vmatprep.subr.mxu0 %v52
    %129 = vmatpush1.msra.mxu0 %v51
    %130 = vmatprep.subr.mxu0 %v50
    %131 = vmatpush1.msra.mxu0 %v49
    %132 = vmatprep.subr.mxu0 %v48
    %133 = vmatpush1.msra.mxu0 %v47
    %134 = vmatprep.subr.mxu0 0.0
    %135 = vmatpush2.msra.mxu0 0.0
    %136 = vmatprep.subr.mxu0 0.0
    %137 = vmatpush2.msra.mxu0 0.0
    %138 = vmatprep.subr.mxu0 0.0
    %139 = vmatpush2.msra.mxu0 0.0
    %140 = vmatprep.subr.mxu0 0.0
    %141 = vmatpush2.msra.mxu0 0.0
    %142 = vmatprep.subr.mxu0 0.0
    %143 = vmatpush2.msra.mxu0 0.0
    %144 = vmatprep.subr.mxu0 0.0
    %145 = vmatpush2.msra.mxu0 0.0
    %146 = vmatprep.subr.mxu0 0.0
    %147 = vmatpush2.msra.mxu0 0.0
    %148 = vmatprep.subr.mxu0 0.0
    %149 = vmatpush2.msra.mxu0 0.0
    %150 = vmatprep.subr.mxu0 0.0
    %151 = vmatpush2.msra.mxu0 0.0
    %152 = vmatprep.subr.mxu0 0.0
    %153 = vmatpush2.msra.mxu0 0.0
    %154 = vmatprep.subr.mxu0 0.0
    %155 = vmatpush2.msra.mxu0 0.0
    %156 = vmatprep.subr.mxu0 0.0
    %157 = vmatpush2.msra.mxu0 0.0
    %158 = vmatprep.subr.mxu0 0.0
    %159 = vmatpush2.msra.mxu0 0.0
    %160 = vmatprep.subr.mxu0 0.0
    %161 = vmatpush2.msra.mxu0 0.0
    %162 = vmatprep.subr.mxu0 0.0
    %163 = vmatpush2.msra.mxu0 0.0
    %164 = vmatprep.subr.mxu0 0.0
    %165 = vmatpush2.msra.mxu0 0.0
    %166 = vmatprep.mubr.f32.mxu0 0.0
    %167 = vmatmul.mubr.f32.gmra.mxu0 %v69
    %v168 = vpop.f32.mrf.mxu0
    %v169 = vadd.f32 %v60, %v168
    %v170 = vpop.f32.mrf.mxu0
    %v171 = vadd.f32 %v64, %v170
    %172 = vmatprep.mubr.f32.mxu0 0.0
    %173 = vmatmul.mubr.f32.gmra.mxu0 %v72
    %v174 = vpop.f32.mrf.mxu0
    %v175 = vadd.f32 %v60, %v174
    %v176 = vpop.f32.mrf.mxu0
    %v177 = vadd.f32 %v64, %v176
    %178 = vmatprep.mubr.f32.mxu0 0.0
    %179 = vmatmul.mubr.f32.gmra.mxu0 %v75
    %v180 = vpop.f32.mrf.mxu0
    %v181 = vadd.f32 %v60, %v180
    %v182 = vpop.f32.mrf.mxu0
    %v183 = vadd.f32 %v64, %v182
    %184 = vmatprep.mubr.f32.mxu0 0.0
    %185 = vmatmul.mubr.f32.gmra.mxu0 %v78
    %v186 = vpop.f32.mrf.mxu0
    %v187 = vadd.f32 %v60, %v186
    %v188 = vpop.f32.mrf.mxu0
    %v189 = vadd.f32 %v64, %v188
    %190 = vmatprep.mubr.f32.mxu0 0.0
    %191 = vmatmul.mubr.f32.gmra.mxu0 %v81
    %v192 = vpop.f32.mrf.mxu0
    %v193 = vadd.f32 %v60, %v192
    %v194 = vpop.f32.mrf.mxu0
    %v195 = vadd.f32 %v64, %v194
    %196 = vmatprep.mubr.f32.mxu0 0.0
    %197 = vmatmul.mubr.f32.gmra.mxu0 %v84
    %v198 = vpop.f32.mrf.mxu0
    %v199 = vadd.f32 %v60, %v198
    %v200 = vpop.f32.mrf.mxu0
    %v201 = vadd.f32 %v64, %v200
    %202 = vmatprep.mubr.f32.mxu0 0.0
    %203 = vmatmul.mubr.f32.gmra.mxu0 %v87
    %v204 = vpop.f32.mrf.mxu0
    %v205 = vadd.f32 %v60, %v204
    %v206 = vpop.f32.mrf.mxu0
    %v207 = vadd.f32 %v64, %v206
    %208 = vmatprep.mubr.f32.mxu0 0.0
    %209 = vmatmul.mubr.f32.gmra.mxu0 %v90
    %v210 = vpop.f32.mrf.mxu0
    %v211 = vadd.f32 %v60, %v210
    %v212 = vpop.f32.mrf.mxu0
    %v213 = vadd.f32 %v64, %v212
    %214 = vmatprep.mubr.f32.mxu0 0.0
    %215 = vmatmul.mubr.f32.gmra.mxu0 %v93
    %v216 = vpop.f32.mrf.mxu0
    %v217 = vadd.f32 %v60, %v216
    %v218 = vpop.f32.mrf.mxu0
    %v219 = vadd.f32 %v64, %v218
    %220 = vdwg.mxu0
    %v221 = vld [vmem:[%s3] sm:$0xff]
    %v222 = vld [vmem:[%s3 + $0x8] sm:$0xff]
    %v223 = vld [vmem:[%s3 + $0x10] sm:$0xff]
    %v224 = vld [vmem:[%s3 + $0x18] sm:$0xff]
    %v225 = vld [vmem:[%s3 + $0x20] sm:$0xff]
    %v226 = vld [vmem:[%s3 + $0x28] sm:$0xff]
    %v227 = vld [vmem:[%s3 + $0x30] sm:$0xff]
    %v228 = vld [vmem:[%s3 + $0x38] sm:$0xff]
    %v229 = vld [vmem:[%s3 + $0x40] sm:$0xff]
    %v230 = vld [vmem:[%s3 + $0x48] sm:$0xff]
    %v231 = vld [vmem:[%s3 + $0x50] sm:$0xff]
    %v232 = vld [vmem:[%s3 + $0x58] sm:$0xff]
    %v233 = vld [vmem:[%s3 + $0x60] sm:$0xff]
    %v234 = vld [vmem:[%s3 + $0x68] sm:$0xff]
    %v235 = vld [vmem:[%s3 + $0x70] sm:$0xff]
    %v236 = vld [vmem:[%s3 + $0x78] sm:$0xff]
    %v237 = vtanh.pop %v169
    %v238 = vtanh.pop %v171
    %v239 = vmul.f32 %v237, 0.5
    %v240 = vmul.f32 %v238, 0.5
    %v241 = vadd.f32 %v239, 0.5
    %v242 = vadd.f32 %v240, 0.5
    %v243 = vmul.f32 %v241, 0.0
    %245 = vrot.lane.b32.xlu0 %v238, 64
    %v246 = vpop.permute.xlu0 %245
    %v248 = vmul.f32 %v241, %v246
    %250 = vrot.lane.b32.xlu0 %v248, 64
    %v251 = vpop.permute.xlu0 %250
    %v253 = vadd.f32 %v243, %v251
    %v254 = vtanh.pop %v253
    %256 = vrot.lane.b32.xlu0 %v254, 64
    %v257 = vpop.permute.xlu0 %256
    %v259 = vmul.f32 %v242, %v257
    %vm260 = vcmask 523264
    %v262 = vsel %vm260, %v259, 0
    %264 = vmatprep.subr.mxu0 0.0
    %265 = vmatpush1.msra.mxu0 0.0
    %266 = vmatprep.subr.mxu0 0.0
    %267 = vmatpush1.msra.mxu0 0.0
    %268 = vmatprep.subr.mxu0 0.0
    %269 = vmatpush1.msra.mxu0 0.0
    %270 = vmatprep.subr.mxu0 0.0
    %271 = vmatpush1.msra.mxu0 0.0
    %272 = vmatprep.subr.mxu0 0.0
    %273 = vmatpush1.msra.mxu0 0.0
    %274 = vmatprep.subr.mxu0 0.0
    %275 = vmatpush1.msra.mxu0 0.0
    %276 = vmatprep.subr.mxu0 0.0
    %277 = vmatpush1.msra.mxu0 0.0
    %278 = vmatprep.subr.mxu0 0.0
    %279 = vmatpush1.msra.mxu0 0.0
    %280 = vmatprep.subr.mxu0 %v236
    %281 = vmatpush1.msra.mxu0 %v235
    %282 = vmatprep.subr.mxu0 %v234
    %283 = vmatpush1.msra.mxu0 %v233
    %284 = vmatprep.subr.mxu0 %v232
    %285 = vmatpush1.msra.mxu0 %v231
    %286 = vmatprep.subr.mxu0 %v230
    %287 = vmatpush1.msra.mxu0 %v229
    %288 = vmatprep.subr.mxu0 %v228
    %289 = vmatpush1.msra.mxu0 %v227
    %290 = vmatprep.subr.mxu0 %v226
    %291 = vmatpush1.msra.mxu0 %v225
    %292 = vmatprep.subr.mxu0 %v224
    %293 = vmatpush1.msra.mxu0 %v223
    %294 = vmatprep.subr.mxu0 %v222
    %295 = vmatpush1.msra.mxu0 %v221
    %296 = vmatprep.subr.mxu0 0.0
    %297 = vmatpush2.msra.mxu0 0.0
    %298 = vmatprep.subr.mxu0 0.0
    %299 = vmatpush2.msra.mxu0 0.0
    %300 = vmatprep.subr.mxu0 0.0
    %301 = vmatpush2.msra.mxu0 0.0
    %302 = vmatprep.subr.mxu0 0.0
    %303 = vmatpush2.msra.mxu0 0.0
    %304 = vmatprep.subr.mxu0 0.0
    %305 = vmatpush2.msra.mxu0 0.0
    %306 = vmatprep.subr.mxu0 0.0
    %307 = vmatpush2.msra.mxu0 0.0
    %308 = vmatprep.subr.mxu0 0.0
    %309 = vmatpush2.msra.mxu0 0.0
    %310 = vmatprep.subr.mxu0 0.0
    %311 = vmatpush2.msra.mxu0 0.0
    %312 = vmatprep.subr.mxu0 0.0
    %313 = vmatpush2.msra.mxu0 0.0
    %314 = vmatprep.subr.mxu0 0.0
    %315 = vmatpush2.msra.mxu0 0.0
    %316 = vmatprep.subr.mxu0 0.0
    %317 = vmatpush2.msra.mxu0 0.0
    %318 = vmatprep.subr.mxu0 0.0
    %319 = vmatpush2.msra.mxu0 0.0
    %320 = vmatprep.subr.mxu0 0.0
    %321 = vmatpush2.msra.mxu0 0.0
    %322 = vmatprep.subr.mxu0 0.0
    %323 = vmatpush2.msra.mxu0 0.0
    %324 = vmatprep.subr.mxu0 0.0
    %325 = vmatpush2.msra.mxu0 0.0
    %326 = vmatprep.subr.mxu0 0.0
    %327 = vmatpush2.msra.mxu0 0.0
    %328 = vmatprep.mubr.f32.mxu0 0.0
    %329 = vmatmul.mubr.f32.gmra.mxu0 %v262
    %v330 = vpop.f32.mrf.mxu0
    %v331 = vadd.f32 0.0, %v330
    %v332 = vpop.f32.mrf.mxu0
    %v333 = vadd.f32 0.0, %v332
    %334 = vdwg.mxu0
    %v335 = vadd.f32 %v175, %v331
    %v336 = vadd.f32 %v177, %v333
    %v337 = vtanh.pop %v335
    %v338 = vtanh.pop %v336
    %v339 = vmul.f32 %v337, 0.5
    %v340 = vmul.f32 %v338, 0.5
    %v341 = vadd.f32 %v339, 0.5
    %v342 = vadd.f32 %v340, 0.5
    %v343 = vmul.f32 %v341, %v253
    %345 = vrot.lane.b32.xlu0 %v338, 64
    %v346 = vpop.permute.xlu0 %345
    %v348 = vmul.f32 %v341, %v346
    %350 = vrot.lane.b32.xlu0 %v348, 64
    %v351 = vpop.permute.xlu0 %350
    %v353 = vadd.f32 %v343, %v351
    %v354 = vtanh.pop %v353
    %356 = vrot.lane.b32.xlu0 %v354, 64
    %v357 = vpop.permute.xlu0 %356
    %v359 = vmul.f32 %v342, %v357
    %v361 = vsel %vm260, %v359, 0
    %363 = vmatprep.subr.mxu0 0.0
    %364 = vmatpush1.msra.mxu0 0.0
    %365 = vmatprep.subr.mxu0 0.0
    %366 = vmatpush1.msra.mxu0 0.0
    %367 = vmatprep.subr.mxu0 0.0
    %368 = vmatpush1.msra.mxu0 0.0
    %369 = vmatprep.subr.mxu0 0.0
    %370 = vmatpush1.msra.mxu0 0.0
    %371 = vmatprep.subr.mxu0 0.0
    %372 = vmatpush1.msra.mxu0 0.0
    %373 = vmatprep.subr.mxu0 0.0
    %374 = vmatpush1.msra.mxu0 0.0
    %375 = vmatprep.subr.mxu0 0.0
    %376 = vmatpush1.msra.mxu0 0.0
    %377 = vmatprep.subr.mxu0 0.0
    %378 = vmatpush1.msra.mxu0 0.0
    %379 = vmatprep.subr.mxu0 %v236
    %380 = vmatpush1.msra.mxu0 %v235
    %381 = vmatprep.subr.mxu0 %v234
    %382 = vmatpush1.msra.mxu0 %v233
    %383 = vmatprep.subr.mxu0 %v232
    %384 = vmatpush1.msra.mxu0 %v231
    %385 = vmatprep.subr.mxu0 %v230
    %386 = vmatpush1.msra.mxu0 %v229
    %387 = vmatprep.subr.mxu0 %v228
    %388 = vmatpush1.msra.mxu0 %v227
    %389 = vmatprep.subr.mxu0 %v226
    %390 = vmatpush1.msra.mxu0 %v225
    %391 = vmatprep.subr.mxu0 %v224
    %392 = vmatpush1.msra.mxu0 %v223
    %393 = vmatprep.subr.mxu0 %v222
    %394 = vmatpush1.msra.mxu0 %v221
    %395 = vmatprep.subr.mxu0 0.0
    %396 = vmatpush2.msra.mxu0 0.0
    %397 = vmatprep.subr.mxu0 0.0
    %398 = vmatpush2.msra.mxu0 0.0
    %399 = vmatprep.subr.mxu0 0.0
    %400 = vmatpush2.msra.mxu0 0.0
    %401 = vmatprep.subr.mxu0 0.0
    %402 = vmatpush2.msra.mxu0 0.0
    %403 = vmatprep.subr.mxu0 0.0
    %404 = vmatpush2.msra.mxu0 0.0
    %405 = vmatprep.subr.mxu0 0.0
    %406 = vmatpush2.msra.mxu0 0.0
    %407 = vmatprep.subr.mxu0 0.0
    %408 = vmatpush2.msra.mxu0 0.0
    %409 = vmatprep.subr.mxu0 0.0
    %410 = vmatpush2.msra.mxu0 0.0
    %411 = vmatprep.subr.mxu0 0.0
    %412 = vmatpush2.msra.mxu0 0.0
    %413 = vmatprep.subr.mxu0 0.0
    %414 = vmatpush2.msra.mxu0 0.0
    %415 = vmatprep.subr.mxu0 0.0
    %416 = vmatpush2.msra.mxu0 0.0
    %417 = vmatprep.subr.mxu0 0.0
    %418 = vmatpush2.msra.mxu0 0.0
    %419 = vmatprep.subr.mxu0 0.0
    %420 = vmatpush2.msra.mxu0 0.0
    %421 = vmatprep.subr.mxu0 0.0
    %422 = vmatpush2.msra.mxu0 0.0
    %423 = vmatprep.subr.mxu0 0.0
    %424 = vmatpush2.msra.mxu0 0.0
    %425 = vmatprep.subr.mxu0 0.0
    %426 = vmatpush2.msra.mxu0 0.0
    %427 = vmatprep.mubr.f32.mxu0 0.0
    %428 = vmatmul.mubr.f32.gmra.mxu0 %v361
    %v429 = vpop.f32.mrf.mxu0
    %v430 = vadd.f32 0.0, %v429
    %v431 = vpop.f32.mrf.mxu0
    %v432 = vadd.f32 0.0, %v431
    %433 = vdwg.mxu0
    %v434 = vadd.f32 %v181, %v430
    %v435 = vadd.f32 %v183, %v432
    %v436 = vtanh.pop %v434
    %v437 = vtanh.pop %v435
    %v438 = vmul.f32 %v436, 0.5
    %v439 = vmul.f32 %v437, 0.5
    %v440 = vadd.f32 %v438, 0.5
    %v441 = vadd.f32 %v439, 0.5
    %v442 = vmul.f32 %v440, %v353
    %444 = vrot.lane.b32.xlu0 %v437, 64
    %v445 = vpop.permute.xlu0 %444
    %v447 = vmul.f32 %v440, %v445
    %449 = vrot.lane.b32.xlu0 %v447, 64
    %v450 = vpop.permute.xlu0 %449
    %v452 = vadd.f32 %v442, %v450
    %v453 = vtanh.pop %v452
    %455 = vrot.lane.b32.xlu0 %v453, 64
    %v456 = vpop.permute.xlu0 %455
    %v458 = vmul.f32 %v441, %v456
    %v460 = vsel %vm260, %v458, 0
    %462 = vmatprep.subr.mxu0 0.0
    %463 = vmatpush1.msra.mxu0 0.0
    %464 = vmatprep.subr.mxu0 0.0
    %465 = vmatpush1.msra.mxu0 0.0
    %466 = vmatprep.subr.mxu0 0.0
    %467 = vmatpush1.msra.mxu0 0.0
    %468 = vmatprep.subr.mxu0 0.0
    %469 = vmatpush1.msra.mxu0 0.0
    %470 = vmatprep.subr.mxu0 0.0
    %471 = vmatpush1.msra.mxu0 0.0
    %472 = vmatprep.subr.mxu0 0.0
    %473 = vmatpush1.msra.mxu0 0.0
    %474 = vmatprep.subr.mxu0 0.0
    %475 = vmatpush1.msra.mxu0 0.0
    %476 = vmatprep.subr.mxu0 0.0
    %477 = vmatpush1.msra.mxu0 0.0
    %478 = vmatprep.subr.mxu0 %v236
    %479 = vmatpush1.msra.mxu0 %v235
    %480 = vmatprep.subr.mxu0 %v234
    %481 = vmatpush1.msra.mxu0 %v233
    %482 = vmatprep.subr.mxu0 %v232
    %483 = vmatpush1.msra.mxu0 %v231
    %484 = vmatprep.subr.mxu0 %v230
    %485 = vmatpush1.msra.mxu0 %v229
    %486 = vmatprep.subr.mxu0 %v228
    %487 = vmatpush1.msra.mxu0 %v227
    %488 = vmatprep.subr.mxu0 %v226
    %489 = vmatpush1.msra.mxu0 %v225
    %490 = vmatprep.subr.mxu0 %v224
    %491 = vmatpush1.msra.mxu0 %v223
    %492 = vmatprep.subr.mxu0 %v222
    %493 = vmatpush1.msra.mxu0 %v221
    %494 = vmatprep.subr.mxu0 0.0
    %495 = vmatpush2.msra.mxu0 0.0
    %496 = vmatprep.subr.mxu0 0.0
    %497 = vmatpush2.msra.mxu0 0.0
    %498 = vmatprep.subr.mxu0 0.0
    %499 = vmatpush2.msra.mxu0 0.0
    %500 = vmatprep.subr.mxu0 0.0
    %501 = vmatpush2.msra.mxu0 0.0
    %502 = vmatprep.subr.mxu0 0.0
    %503 = vmatpush2.msra.mxu0 0.0
    %504 = vmatprep.subr.mxu0 0.0
    %505 = vmatpush2.msra.mxu0 0.0
    %506 = vmatprep.subr.mxu0 0.0
    %507 = vmatpush2.msra.mxu0 0.0
    %508 = vmatprep.subr.mxu0 0.0
    %509 = vmatpush2.msra.mxu0 0.0
    %510 = vmatprep.subr.mxu0 0.0
    %511 = vmatpush2.msra.mxu0 0.0
    %512 = vmatprep.subr.mxu0 0.0
    %513 = vmatpush2.msra.mxu0 0.0
    %514 = vmatprep.subr.mxu0 0.0
    %515 = vmatpush2.msra.mxu0 0.0
    %516 = vmatprep.subr.mxu0 0.0
    %517 = vmatpush2.msra.mxu0 0.0
    %518 = vmatprep.subr.mxu0 0.0
    %519 = vmatpush2.msra.mxu0 0.0
    %520 = vmatprep.subr.mxu0 0.0
    %521 = vmatpush2.msra.mxu0 0.0
    %522 = vmatprep.subr.mxu0 0.0
    %523 = vmatpush2.msra.mxu0 0.0
    %524 = vmatprep.subr.mxu0 0.0
    %525 = vmatpush2.msra.mxu0 0.0
    %526 = vmatprep.mubr.f32.mxu0 0.0
    %527 = vmatmul.mubr.f32.gmra.mxu0 %v460
    %v528 = vpop.f32.mrf.mxu0
    %v529 = vadd.f32 0.0, %v528
    %v530 = vpop.f32.mrf.mxu0
    %v531 = vadd.f32 0.0, %v530
    %532 = vdwg.mxu0
    %v533 = vadd.f32 %v187, %v529
    %v534 = vadd.f32 %v189, %v531
    %v535 = vtanh.pop %v533
    %v536 = vtanh.pop %v534
    %v537 = vmul.f32 %v535, 0.5
    %v538 = vmul.f32 %v536, 0.5
    %v539 = vadd.f32 %v537, 0.5
    %v540 = vadd.f32 %v538, 0.5
    %v541 = vmul.f32 %v539, %v452
    %543 = vrot.lane.b32.xlu0 %v536, 64
    %v544 = vpop.permute.xlu0 %543
    %v546 = vmul.f32 %v539, %v544
    %548 = vrot.lane.b32.xlu0 %v546, 64
    %v549 = vpop.permute.xlu0 %548
    %v551 = vadd.f32 %v541, %v549
    %v552 = vtanh.pop %v551
    %554 = vrot.lane.b32.xlu0 %v552, 64
    %v555 = vpop.permute.xlu0 %554
    %v557 = vmul.f32 %v540, %v555
    %v559 = vsel %vm260, %v557, 0
    %561 = vmatprep.subr.mxu0 0.0
    %562 = vmatpush1.msra.mxu0 0.0
    %563 = vmatprep.subr.mxu0 0.0
    %564 = vmatpush1.msra.mxu0 0.0
    %565 = vmatprep.subr.mxu0 0.0
    %566 = vmatpush1.msra.mxu0 0.0
    %567 = vmatprep.subr.mxu0 0.0
    %568 = vmatpush1.msra.mxu0 0.0
    %569 = vmatprep.subr.mxu0 0.0
    %570 = vmatpush1.msra.mxu0 0.0
    %571 = vmatprep.subr.mxu0 0.0
    %572 = vmatpush1.msra.mxu0 0.0
    %573 = vmatprep.subr.mxu0 0.0
    %574 = vmatpush1.msra.mxu0 0.0
    %575 = vmatprep.subr.mxu0 0.0
    %576 = vmatpush1.msra.mxu0 0.0
    %577 = vmatprep.subr.mxu0 %v236
    %578 = vmatpush1.msra.mxu0 %v235
    %579 = vmatprep.subr.mxu0 %v234
    %580 = vmatpush1.msra.mxu0 %v233
    %581 = vmatprep.subr.mxu0 %v232
    %582 = vmatpush1.msra.mxu0 %v231
    %583 = vmatprep.subr.mxu0 %v230
    %584 = vmatpush1.msra.mxu0 %v229
    %585 = vmatprep.subr.mxu0 %v228
    %586 = vmatpush1.msra.mxu0 %v227
    %587 = vmatprep.subr.mxu0 %v226
    %588 = vmatpush1.msra.mxu0 %v225
    %589 = vmatprep.subr.mxu0 %v224
    %590 = vmatpush1.msra.mxu0 %v223
    %591 = vmatprep.subr.mxu0 %v222
    %592 = vmatpush1.msra.mxu0 %v221
    %593 = vmatprep.subr.mxu0 0.0
    %594 = vmatpush2.msra.mxu0 0.0
    %595 = vmatprep.subr.mxu0 0.0
    %596 = vmatpush2.msra.mxu0 0.0
    %597 = vmatprep.subr.mxu0 0.0
    %598 = vmatpush2.msra.mxu0 0.0
    %599 = vmatprep.subr.mxu0 0.0
    %600 = vmatpush2.msra.mxu0 0.0
    %601 = vmatprep.subr.mxu0 0.0
    %602 = vmatpush2.msra.mxu0 0.0
    %603 = vmatprep.subr.mxu0 0.0
    %604 = vmatpush2.msra.mxu0 0.0
    %605 = vmatprep.subr.mxu0 0.0
    %606 = vmatpush2.msra.mxu0 0.0
    %607 = vmatprep.subr.mxu0 0.0
    %608 = vmatpush2.msra.mxu0 0.0
    %609 = vmatprep.subr.mxu0 0.0
    %610 = vmatpush2.msra.mxu0 0.0
    %611 = vmatprep.subr.mxu0 0.0
    %612 = vmatpush2.msra.mxu0 0.0
    %613 = vmatprep.subr.mxu0 0.0
    %614 = vmatpush2.msra.mxu0 0.0
    %615 = vmatprep.subr.mxu0 0.0
    %616 = vmatpush2.msra.mxu0 0.0
    %617 = vmatprep.subr.mxu0 0.0
    %618 = vmatpush2.msra.mxu0 0.0
    %619 = vmatprep.subr.mxu0 0.0
    %620 = vmatpush2.msra.mxu0 0.0
    %621 = vmatprep.subr.mxu0 0.0
    %622 = vmatpush2.msra.mxu0 0.0
    %623 = vmatprep.subr.mxu0 0.0
    %624 = vmatpush2.msra.mxu0 0.0
    %625 = vmatprep.mubr.f32.mxu0 0.0
    %626 = vmatmul.mubr.f32.gmra.mxu0 %v559
    %v627 = vpop.f32.mrf.mxu0
    %v628 = vadd.f32 0.0, %v627
    %v629 = vpop.f32.mrf.mxu0
    %v630 = vadd.f32 0.0, %v629
    %631 = vdwg.mxu0
    %v632 = vadd.f32 %v193, %v628
    %v633 = vadd.f32 %v195, %v630
    %v634 = vtanh.pop %v632
    %v635 = vtanh.pop %v633
    %v636 = vmul.f32 %v634, 0.5
    %v637 = vmul.f32 %v635, 0.5
    %v638 = vadd.f32 %v636, 0.5
    %v639 = vadd.f32 %v637, 0.5
    %v640 = vmul.f32 %v638, %v551
    %642 = vrot.lane.b32.xlu0 %v635, 64
    %v643 = vpop.permute.xlu0 %642
    %v645 = vmul.f32 %v638, %v643
    %647 = vrot.lane.b32.xlu0 %v645, 64
    %v648 = vpop.permute.xlu0 %647
    %v650 = vadd.f32 %v640, %v648
    %v651 = vtanh.pop %v650
    %653 = vrot.lane.b32.xlu0 %v651, 64
    %v654 = vpop.permute.xlu0 %653
    %v656 = vmul.f32 %v639, %v654
    %v658 = vsel %vm260, %v656, 0
    %660 = vmatprep.subr.mxu0 0.0
    %661 = vmatpush1.msra.mxu0 0.0
    %662 = vmatprep.subr.mxu0 0.0
    %663 = vmatpush1.msra.mxu0 0.0
    %664 = vmatprep.subr.mxu0 0.0
    %665 = vmatpush1.msra.mxu0 0.0
    %666 = vmatprep.subr.mxu0 0.0
    %667 = vmatpush1.msra.mxu0 0.0
    %668 = vmatprep.subr.mxu0 0.0
    %669 = vmatpush1.msra.mxu0 0.0
    %670 = vmatprep.subr.mxu0 0.0
    %671 = vmatpush1.msra.mxu0 0.0
    %672 = vmatprep.subr.mxu0 0.0
    %673 = vmatpush1.msra.mxu0 0.0
    %674 = vmatprep.subr.mxu0 0.0
    %675 = vmatpush1.msra.mxu0 0.0
    %676 = vmatprep.subr.mxu0 %v236
    %677 = vmatpush1.msra.mxu0 %v235
    %678 = vmatprep.subr.mxu0 %v234
    %679 = vmatpush1.msra.mxu0 %v233
    %680 = vmatprep.subr.mxu0 %v232
    %681 = vmatpush1.msra.mxu0 %v231
    %682 = vmatprep.subr.mxu0 %v230
    %683 = vmatpush1.msra.mxu0 %v229
    %684 = vmatprep.subr.mxu0 %v228
    %685 = vmatpush1.msra.mxu0 %v227
    %686 = vmatprep.subr.mxu0 %v226
    %687 = vmatpush1.msra.mxu0 %v225
    %688 = vmatprep.subr.mxu0 %v224
    %689 = vmatpush1.msra.mxu0 %v223
    %690 = vmatprep.subr.mxu0 %v222
    %691 = vmatpush1.msra.mxu0 %v221
    %692 = vmatprep.subr.mxu0 0.0
    %693 = vmatpush2.msra.mxu0 0.0
    %694 = vmatprep.subr.mxu0 0.0
    %695 = vmatpush2.msra.mxu0 0.0
    %696 = vmatprep.subr.mxu0 0.0
    %697 = vmatpush2.msra.mxu0 0.0
    %698 = vmatprep.subr.mxu0 0.0
    %699 = vmatpush2.msra.mxu0 0.0
    %700 = vmatprep.subr.mxu0 0.0
    %701 = vmatpush2.msra.mxu0 0.0
    %702 = vmatprep.subr.mxu0 0.0
    %703 = vmatpush2.msra.mxu0 0.0
    %704 = vmatprep.subr.mxu0 0.0
    %705 = vmatpush2.msra.mxu0 0.0
    %706 = vmatprep.subr.mxu0 0.0
    %707 = vmatpush2.msra.mxu0 0.0
    %708 = vmatprep.subr.mxu0 0.0
    %709 = vmatpush2.msra.mxu0 0.0
    %710 = vmatprep.subr.mxu0 0.0
    %711 = vmatpush2.msra.mxu0 0.0
    %712 = vmatprep.subr.mxu0 0.0
    %713 = vmatpush2.msra.mxu0 0.0
    %714 = vmatprep.subr.mxu0 0.0
    %715 = vmatpush2.msra.mxu0 0.0
    %716 = vmatprep.subr.mxu0 0.0
    %717 = vmatpush2.msra.mxu0 0.0
    %718 = vmatprep.subr.mxu0 0.0
    %719 = vmatpush2.msra.mxu0 0.0
    %720 = vmatprep.subr.mxu0 0.0
    %721 = vmatpush2.msra.mxu0 0.0
    %722 = vmatprep.subr.mxu0 0.0
    %723 = vmatpush2.msra.mxu0 0.0
    %724 = vmatprep.mubr.f32.mxu0 0.0
    %725 = vmatmul.mubr.f32.gmra.mxu0 %v658
    %v726 = vpop.f32.mrf.mxu0
    %v727 = vadd.f32 0.0, %v726
    %v728 = vpop.f32.mrf.mxu0
    %v729 = vadd.f32 0.0, %v728
    %730 = vdwg.mxu0
    %v731 = vadd.f32 %v199, %v727
    %v732 = vadd.f32 %v201, %v729
    %v733 = vtanh.pop %v731
    %v734 = vtanh.pop %v732
    %v735 = vmul.f32 %v733, 0.5
    %v736 = vmul.f32 %v734, 0.5
    %v737 = vadd.f32 %v735, 0.5
    %v738 = vadd.f32 %v736, 0.5
    %v739 = vmul.f32 %v737, %v650
    %741 = vrot.lane.b32.xlu0 %v734, 64
    %v742 = vpop.permute.xlu0 %741
    %v744 = vmul.f32 %v737, %v742
    %746 = vrot.lane.b32.xlu0 %v744, 64
    %v747 = vpop.permute.xlu0 %746
    %v749 = vadd.f32 %v739, %v747
    %v750 = vtanh.pop %v749
    %752 = vrot.lane.b32.xlu0 %v750, 64
    %v753 = vpop.permute.xlu0 %752
    %v755 = vmul.f32 %v738, %v753
    %v757 = vsel %vm260, %v755, 0
    %759 = vmatprep.subr.mxu0 0.0
    %760 = vmatpush1.msra.mxu0 0.0
    %761 = vmatprep.subr.mxu0 0.0
    %762 = vmatpush1.msra.mxu0 0.0
    %763 = vmatprep.subr.mxu0 0.0
    %764 = vmatpush1.msra.mxu0 0.0
    %765 = vmatprep.subr.mxu0 0.0
    %766 = vmatpush1.msra.mxu0 0.0
    %767 = vmatprep.subr.mxu0 0.0
    %768 = vmatpush1.msra.mxu0 0.0
    %769 = vmatprep.subr.mxu0 0.0
    %770 = vmatpush1.msra.mxu0 0.0
    %771 = vmatprep.subr.mxu0 0.0
    %772 = vmatpush1.msra.mxu0 0.0
    %773 = vmatprep.subr.mxu0 0.0
    %774 = vmatpush1.msra.mxu0 0.0
    %775 = vmatprep.subr.mxu0 %v236
    %776 = vmatpush1.msra.mxu0 %v235
    %777 = vmatprep.subr.mxu0 %v234
    %778 = vmatpush1.msra.mxu0 %v233
    %779 = vmatprep.subr.mxu0 %v232
    %780 = vmatpush1.msra.mxu0 %v231
    %781 = vmatprep.subr.mxu0 %v230
    %782 = vmatpush1.msra.mxu0 %v229
    %783 = vmatprep.subr.mxu0 %v228
    %784 = vmatpush1.msra.mxu0 %v227
    %785 = vmatprep.subr.mxu0 %v226
    %786 = vmatpush1.msra.mxu0 %v225
    %787 = vmatprep.subr.mxu0 %v224
    %788 = vmatpush1.msra.mxu0 %v223
    %789 = vmatprep.subr.mxu0 %v222
    %790 = vmatpush1.msra.mxu0 %v221
    %791 = vmatprep.subr.mxu0 0.0
    %792 = vmatpush2.msra.mxu0 0.0
    %793 = vmatprep.subr.mxu0 0.0
    %794 = vmatpush2.msra.mxu0 0.0
    %795 = vmatprep.subr.mxu0 0.0
    %796 = vmatpush2.msra.mxu0 0.0
    %797 = vmatprep.subr.mxu0 0.0
    %798 = vmatpush2.msra.mxu0 0.0
    %799 = vmatprep.subr.mxu0 0.0
    %800 = vmatpush2.msra.mxu0 0.0
    %801 = vmatprep.subr.mxu0 0.0
    %802 = vmatpush2.msra.mxu0 0.0
    %803 = vmatprep.subr.mxu0 0.0
    %804 = vmatpush2.msra.mxu0 0.0
    %805 = vmatprep.subr.mxu0 0.0
    %806 = vmatpush2.msra.mxu0 0.0
    %807 = vmatprep.subr.mxu0 0.0
    %808 = vmatpush2.msra.mxu0 0.0
    %809 = vmatprep.subr.mxu0 0.0
    %810 = vmatpush2.msra.mxu0 0.0
    %811 = vmatprep.subr.mxu0 0.0
    %812 = vmatpush2.msra.mxu0 0.0
    %813 = vmatprep.subr.mxu0 0.0
    %814 = vmatpush2.msra.mxu0 0.0
    %815 = vmatprep.subr.mxu0 0.0
    %816 = vmatpush2.msra.mxu0 0.0
    %817 = vmatprep.subr.mxu0 0.0
    %818 = vmatpush2.msra.mxu0 0.0
    %819 = vmatprep.subr.mxu0 0.0
    %820 = vmatpush2.msra.mxu0 0.0
    %821 = vmatprep.subr.mxu0 0.0
    %822 = vmatpush2.msra.mxu0 0.0
    %823 = vmatprep.mubr.f32.mxu0 0.0
    %824 = vmatmul.mubr.f32.gmra.mxu0 %v757
    %v825 = vpop.f32.mrf.mxu0
    %v826 = vadd.f32 0.0, %v825
    %v827 = vpop.f32.mrf.mxu0
    %v828 = vadd.f32 0.0, %v827
    %829 = vdwg.mxu0
    %v830 = vadd.f32 %v205, %v826
    %v831 = vadd.f32 %v207, %v828
    %v832 = vtanh.pop %v830
    %v833 = vtanh.pop %v831
    %v834 = vmul.f32 %v832, 0.5
    %v835 = vmul.f32 %v833, 0.5
    %v836 = vadd.f32 %v834, 0.5
    %v837 = vadd.f32 %v835, 0.5
    %v838 = vmul.f32 %v836, %v749
    %840 = vrot.lane.b32.xlu0 %v833, 64
    %v841 = vpop.permute.xlu0 %840
    %v843 = vmul.f32 %v836, %v841
    %845 = vrot.lane.b32.xlu0 %v843, 64
    %v846 = vpop.permute.xlu0 %845
    %v848 = vadd.f32 %v838, %v846
    %v849 = vtanh.pop %v848
    %851 = vrot.lane.b32.xlu0 %v849, 64
    %v852 = vpop.permute.xlu0 %851
    %v854 = vmul.f32 %v837, %v852
    %v856 = vsel %vm260, %v854, 0
    %858 = vmatprep.subr.mxu0 0.0
    %859 = vmatpush1.msra.mxu0 0.0
    %860 = vmatprep.subr.mxu0 0.0
    %861 = vmatpush1.msra.mxu0 0.0
    %862 = vmatprep.subr.mxu0 0.0
    %863 = vmatpush1.msra.mxu0 0.0
    %864 = vmatprep.subr.mxu0 0.0
    %865 = vmatpush1.msra.mxu0 0.0
    %866 = vmatprep.subr.mxu0 0.0
    %867 = vmatpush1.msra.mxu0 0.0
    %868 = vmatprep.subr.mxu0 0.0
    %869 = vmatpush1.msra.mxu0 0.0
    %870 = vmatprep.subr.mxu0 0.0
    %871 = vmatpush1.msra.mxu0 0.0
    %872 = vmatprep.subr.mxu0 0.0
    %873 = vmatpush1.msra.mxu0 0.0
    %874 = vmatprep.subr.mxu0 %v236
    %875 = vmatpush1.msra.mxu0 %v235
    %876 = vmatprep.subr.mxu0 %v234
    %877 = vmatpush1.msra.mxu0 %v233
    %878 = vmatprep.subr.mxu0 %v232
    %879 = vmatpush1.msra.mxu0 %v231
    %880 = vmatprep.subr.mxu0 %v230
    %881 = vmatpush1.msra.mxu0 %v229
    %882 = vmatprep.subr.mxu0 %v228
    %883 = vmatpush1.msra.mxu0 %v227
    %884 = vmatprep.subr.mxu0 %v226
    %885 = vmatpush1.msra.mxu0 %v225
    %886 = vmatprep.subr.mxu0 %v224
    %887 = vmatpush1.msra.mxu0 %v223
    %888 = vmatprep.subr.mxu0 %v222
    %889 = vmatpush1.msra.mxu0 %v221
    %890 = vmatprep.subr.mxu0 0.0
    %891 = vmatpush2.msra.mxu0 0.0
    %892 = vmatprep.subr.mxu0 0.0
    %893 = vmatpush2.msra.mxu0 0.0
    %894 = vmatprep.subr.mxu0 0.0
    %895 = vmatpush2.msra.mxu0 0.0
    %896 = vmatprep.subr.mxu0 0.0
    %897 = vmatpush2.msra.mxu0 0.0
    %898 = vmatprep.subr.mxu0 0.0
    %899 = vmatpush2.msra.mxu0 0.0
    %900 = vmatprep.subr.mxu0 0.0
    %901 = vmatpush2.msra.mxu0 0.0
    %902 = vmatprep.subr.mxu0 0.0
    %903 = vmatpush2.msra.mxu0 0.0
    %904 = vmatprep.subr.mxu0 0.0
    %905 = vmatpush2.msra.mxu0 0.0
    %906 = vmatprep.subr.mxu0 0.0
    %907 = vmatpush2.msra.mxu0 0.0
    %908 = vmatprep.subr.mxu0 0.0
    %909 = vmatpush2.msra.mxu0 0.0
    %910 = vmatprep.subr.mxu0 0.0
    %911 = vmatpush2.msra.mxu0 0.0
    %912 = vmatprep.subr.mxu0 0.0
    %913 = vmatpush2.msra.mxu0 0.0
    %914 = vmatprep.subr.mxu0 0.0
    %915 = vmatpush2.msra.mxu0 0.0
    %916 = vmatprep.subr.mxu0 0.0
    %917 = vmatpush2.msra.mxu0 0.0
    %918 = vmatprep.subr.mxu0 0.0
    %919 = vmatpush2.msra.mxu0 0.0
    %920 = vmatprep.subr.mxu0 0.0
    %921 = vmatpush2.msra.mxu0 0.0
    %922 = vmatprep.mubr.f32.mxu0 0.0
    %923 = vmatmul.mubr.f32.gmra.mxu0 %v856
    %v924 = vpop.f32.mrf.mxu0
    %v925 = vadd.f32 0.0, %v924
    %v926 = vpop.f32.mrf.mxu0
    %v927 = vadd.f32 0.0, %v926
    %928 = vdwg.mxu0
    %v929 = vadd.f32 %v211, %v925
    %v930 = vadd.f32 %v213, %v927
    %v931 = vtanh.pop %v929
    %v932 = vtanh.pop %v930
    %v933 = vmul.f32 %v931, 0.5
    %v934 = vmul.f32 %v932, 0.5
    %v935 = vadd.f32 %v933, 0.5
    %v936 = vadd.f32 %v934, 0.5
    %v937 = vmul.f32 %v935, %v848
    %939 = vrot.lane.b32.xlu0 %v932, 64
    %v940 = vpop.permute.xlu0 %939
    %v942 = vmul.f32 %v935, %v940
    %944 = vrot.lane.b32.xlu0 %v942, 64
    %v945 = vpop.permute.xlu0 %944
    %v947 = vadd.f32 %v937, %v945
    %v948 = vtanh.pop %v947
    %950 = vrot.lane.b32.xlu0 %v948, 64
    %v951 = vpop.permute.xlu0 %950
    %v953 = vmul.f32 %v936, %v951
    %v955 = vsel %vm260, %v953, 0
    %957 = vmatprep.subr.mxu0 0.0
    %958 = vmatpush1.msra.mxu0 0.0
    %959 = vmatprep.subr.mxu0 0.0
    %960 = vmatpush1.msra.mxu0 0.0
    %961 = vmatprep.subr.mxu0 0.0
    %962 = vmatpush1.msra.mxu0 0.0
    %963 = vmatprep.subr.mxu0 0.0
    %964 = vmatpush1.msra.mxu0 0.0
    %965 = vmatprep.subr.mxu0 0.0
    %966 = vmatpush1.msra.mxu0 0.0
    %967 = vmatprep.subr.mxu0 0.0
    %968 = vmatpush1.msra.mxu0 0.0
    %969 = vmatprep.subr.mxu0 0.0
    %970 = vmatpush1.msra.mxu0 0.0
    %971 = vmatprep.subr.mxu0 0.0
    %972 = vmatpush1.msra.mxu0 0.0
    %973 = vmatprep.subr.mxu0 %v236
    %974 = vmatpush1.msra.mxu0 %v235
    %975 = vmatprep.subr.mxu0 %v234
    %976 = vmatpush1.msra.mxu0 %v233
    %977 = vmatprep.subr.mxu0 %v232
    %978 = vmatpush1.msra.mxu0 %v231
    %979 = vmatprep.subr.mxu0 %v230
    %980 = vmatpush1.msra.mxu0 %v229
    %981 = vmatprep.subr.mxu0 %v228
    %982 = vmatpush1.msra.mxu0 %v227
    %983 = vmatprep.subr.mxu0 %v226
    %984 = vmatpush1.msra.mxu0 %v225
    %985 = vmatprep.subr.mxu0 %v224
    %986 = vmatpush1.msra.mxu0 %v223
    %987 = vmatprep.subr.mxu0 %v222
    %988 = vmatpush1.msra.mxu0 %v221
    %989 = vmatprep.subr.mxu0 0.0
    %990 = vmatpush2.msra.mxu0 0.0
    %991 = vmatprep.subr.mxu0 0.0
    %992 = vmatpush2.msra.mxu0 0.0
    %993 = vmatprep.subr.mxu0 0.0
    %994 = vmatpush2.msra.mxu0 0.0
    %995 = vmatprep.subr.mxu0 0.0
    %996 = vmatpush2.msra.mxu0 0.0
    %997 = vmatprep.subr.mxu0 0.0
    %998 = vmatpush2.msra.mxu0 0.0
    %999 = vmatprep.subr.mxu0 0.0
    %1000 = vmatpush2.msra.mxu0 0.0
    %1001 = vmatprep.subr.mxu0 0.0
    %1002 = vmatpush2.msra.mxu0 0.0
    %1003 = vmatprep.subr.mxu0 0.0
    %1004 = vmatpush2.msra.mxu0 0.0
    %1005 = vmatprep.subr.mxu0 0.0
    %1006 = vmatpush2.msra.mxu0 0.0
    %1007 = vmatprep.subr.mxu0 0.0
    %1008 = vmatpush2.msra.mxu0 0.0
    %1009 = vmatprep.subr.mxu0 0.0
    %1010 = vmatpush2.msra.mxu0 0.0
    %1011 = vmatprep.subr.mxu0 0.0
    %1012 = vmatpush2.msra.mxu0 0.0
    %1013 = vmatprep.subr.mxu0 0.0
    %1014 = vmatpush2.msra.mxu0 0.0
    %1015 = vmatprep.subr.mxu0 0.0
    %1016 = vmatpush2.msra.mxu0 0.0
    %1017 = vmatprep.subr.mxu0 0.0
    %1018 = vmatpush2.msra.mxu0 0.0
    %1019 = vmatprep.subr.mxu0 0.0
    %1020 = vmatpush2.msra.mxu0 0.0
    %1021 = vmatprep.mubr.f32.mxu0 0.0
    %1022 = vmatmul.mubr.f32.gmra.mxu0 %v955
    %v1023 = vpop.f32.mrf.mxu0
    %v1024 = vadd.f32 0.0, %v1023
    %v1025 = vpop.f32.mrf.mxu0
    %v1026 = vadd.f32 0.0, %v1025
    %1027 = vdwg.mxu0
    %v1028 = vadd.f32 %v217, %v1024
    %v1029 = vadd.f32 %v219, %v1026
    %v1030 = vtanh.pop %v1028
    %v1031 = vtanh.pop %v1029
    %v1032 = vmul.f32 %v1030, 0.5
    %v1033 = vmul.f32 %v1031, 0.5
    %v1034 = vadd.f32 %v1032, 0.5
    %v1035 = vadd.f32 %v1033, 0.5
    %v1036 = vmul.f32 %v1034, %v947
    %1038 = vrot.lane.b32.xlu0 %v1031, 64
    %v1039 = vpop.permute.xlu0 %1038
    %v1041 = vmul.f32 %v1034, %v1039
    %1043 = vrot.lane.b32.xlu0 %v1041, 64
    %v1044 = vpop.permute.xlu0 %1043
    %v1046 = vadd.f32 %v1036, %v1044
    %v1047 = vtanh.pop %v1046
    %1049 = vrot.lane.b32.xlu0 %v1047, 64
    %v1050 = vpop.permute.xlu0 %1049
    %v1052 = vmul.f32 %v1035, %v1050
    %v1053 = vld [vmem:[%s4] sm:$0xff]
    %v1054 = vld [vmem:[%s4 + $0x8] sm:$0xff]
    %v1055 = vld [vmem:[%s4 + $0x10] sm:$0xff]
    %v1056 = vld [vmem:[%s4 + $0x18] sm:$0xff]
    %v1057 = vld [vmem:[%s4 + $0x20] sm:$0xff]
    %v1058 = vld [vmem:[%s4 + $0x28] sm:$0xff]
    %v1059 = vld [vmem:[%s4 + $0x30] sm:$0xff]
    %v1060 = vld [vmem:[%s4 + $0x38] sm:$0xff]
    %v1061 = vld [vmem:[%s5] sm:$0x1]
    %v1063 = vlaneseq
    %v1064 = vshrl.u32 %v1063, 7
    %v1065 = vsub.s32 0, %v1064
    %v1066 = vrot.slane %v1061, %v1065
    %v1069 = vsel %vm260, %v1052, 0
    %1071 = vmatprep.subr.mxu0 0.0
    %1072 = vmatpush1.msra.mxu0 0.0
    %1073 = vmatprep.subr.mxu0 0.0
    %1074 = vmatpush1.msra.mxu0 0.0
    %1075 = vmatprep.subr.mxu0 0.0
    %1076 = vmatpush1.msra.mxu0 0.0
    %1077 = vmatprep.subr.mxu0 0.0
    %1078 = vmatpush1.msra.mxu0 0.0
    %1079 = vmatprep.subr.mxu0 0.0
    %1080 = vmatpush1.msra.mxu0 0.0
    %1081 = vmatprep.subr.mxu0 0.0
    %1082 = vmatpush1.msra.mxu0 0.0
    %1083 = vmatprep.subr.mxu0 0.0
    %1084 = vmatpush1.msra.mxu0 0.0
    %1085 = vmatprep.subr.mxu0 0.0
    %1086 = vmatpush1.msra.mxu0 0.0
    %1087 = vmatprep.subr.mxu0 0.0
    %1088 = vmatpush1.msra.mxu0 %v1060
    %1089 = vmatprep.subr.mxu0 0.0
    %1090 = vmatpush1.msra.mxu0 %v1059
    %1091 = vmatprep.subr.mxu0 0.0
    %1092 = vmatpush1.msra.mxu0 %v1058
    %1093 = vmatprep.subr.mxu0 0.0
    %1094 = vmatpush1.msra.mxu0 %v1057
    %1095 = vmatprep.subr.mxu0 0.0
    %1096 = vmatpush1.msra.mxu0 %v1056
    %1097 = vmatprep.subr.mxu0 0.0
    %1098 = vmatpush1.msra.mxu0 %v1055
    %1099 = vmatprep.subr.mxu0 0.0
    %1100 = vmatpush1.msra.mxu0 %v1054
    %1101 = vmatprep.subr.mxu0 0.0
    %1102 = vmatpush1.msra.mxu0 %v1053
    %1103 = vmatprep.subr.mxu0 0.0
    %1104 = vmatpush2.msra.mxu0 0.0
    %1105 = vmatprep.subr.mxu0 0.0
    %1106 = vmatpush2.msra.mxu0 0.0
    %1107 = vmatprep.subr.mxu0 0.0
    %1108 = vmatpush2.msra.mxu0 0.0
    %1109 = vmatprep.subr.mxu0 0.0
    %1110 = vmatpush2.msra.mxu0 0.0
    %1111 = vmatprep.subr.mxu0 0.0
    %1112 = vmatpush2.msra.mxu0 0.0
    %1113 = vmatprep.subr.mxu0 0.0
    %1114 = vmatpush2.msra.mxu0 0.0
    %1115 = vmatprep.subr.mxu0 0.0
    %1116 = vmatpush2.msra.mxu0 0.0
    %1117 = vmatprep.subr.mxu0 0.0
    %1118 = vmatpush2.msra.mxu0 0.0
    %1119 = vmatprep.subr.mxu0 0.0
    %1120 = vmatpush2.msra.mxu0 0.0
    %1121 = vmatprep.subr.mxu0 0.0
    %1122 = vmatpush2.msra.mxu0 0.0
    %1123 = vmatprep.subr.mxu0 0.0
    %1124 = vmatpush2.msra.mxu0 0.0
    %1125 = vmatprep.subr.mxu0 0.0
    %1126 = vmatpush2.msra.mxu0 0.0
    %1127 = vmatprep.subr.mxu0 0.0
    %1128 = vmatpush2.msra.mxu0 0.0
    %1129 = vmatprep.subr.mxu0 0.0
    %1130 = vmatpush2.msra.mxu0 0.0
    %1131 = vmatprep.subr.mxu0 0.0
    %1132 = vmatpush2.msra.mxu0 0.0
    %1133 = vmatprep.subr.mxu0 0.0
    %1134 = vmatpush2.msra.mxu0 0.0
    %1135 = vmatprep.mubr.f32.mxu0 0.0
    %1136 = vmatmul.mubr.f32.gmra.mxu0 %v1069
    %v1137 = vpop.f32.mrf.mxu0
    %v1138 = vadd.f32 %v1066, %v1137
    %v1139 = vpop.f32.mrf.mxu0
    %1140 = vdwg.mxu0
    %vm1141 = vcmask 80896
    %1142 = vst.msk [vmem:[#allocation5] sm:$0xff] %vm1141, %v1138
    // Predicated region
    $region30: #{tpu_custom_call.1} parent=1 // pred_check
      _
    $region31: #{tpu_custom_call.1} parent=1 // pred_check_branch
      %1144 = sbr.rel (0) target = $region33
    $region32: #{tpu_custom_call.1} parent=1 // pred_region
      %s1146 = ssub.s32 128, 128
      %1147 = vsyncadd [#allocation4], %s1146
      %s1149 = sshll.u32 [#allocation5], 4
      %s1150 = int_to_ptr.vmem [resolvable:$true] %s1149
      %1152 = dma.vmem_to_hbm [thread:$0]  %s1150, 128, %s6, [#allocation4]
    $region33: #{tpu_custom_call.1} parent=1 // pred_fallthru
      _
    // Predicated region
    $region34: #{tpu_custom_call.1} parent=1 // pred_check
      _
    $region35: #{tpu_custom_call.1} parent=1 // pred_check_branch
      %1154 = sbr.rel (0) target = $region37
    $region36: #{tpu_custom_call.1} parent=1 // pred_region
      %1155 = dma.done [#allocation4], 128
    $region37: #{tpu_custom_call.1} parent=1 // pred_fallthru
      _
    %1156 = vsyncpa [#allocation3], 1
    %1157 = vsyncpa [#allocation4], 1

</llo_original>
